<compile_context>
chip_gen: v5e
topology: v5e:2x2
jax: 0.10.0
libtpu: 0.0.40
codegen_flags: <defaults>
</compile_context>

<pallas_src>
import functools
import math

import jax
import jax.numpy as jnp
from jax.experimental import pallas as pl
from jax.experimental.pallas import tpu as pltpu


def _round_up(v, m):
    return ((v + m - 1) // m) * m


def _cdiv(a, b):
    return (a + b - 1) // b


@functools.lru_cache(maxsize=None)
def _vmem_limit_bytes():
    # v5e/v6e have 128 MiB VMEM -> 96 MiB; v7x has 64 MiB -> 48 MiB.
    try:
        cap = pltpu.get_tpu_info().vmem_capacity_bytes
    except Exception:
        cap = 64 * 1024 * 1024
    return int(min(cap * 3 // 4, 96 * 1024 * 1024))


def _np_encoder_kernel(x_ref, y_ref, w1x_ref, w1y_ref, b1_ref,
                       w2_ref, b2_ref, w3_ref, b3_ref, out_ref):
    w1x = w1x_ref[...]
    w1y = w1y_ref[...]
    mxu_dtype = w1x.dtype  # bf16 by default; f32 accumulation everywhere.

    # Layer 1 (fused concat): [x | y] @ W1 == x @ W1x + y @ W1y
    h = (jnp.dot(x_ref[...].astype(mxu_dtype), w1x,
                 preferred_element_type=jnp.float32)
         + jnp.dot(y_ref[...].astype(mxu_dtype), w1y,
                   preferred_element_type=jnp.float32)
         + b1_ref[...])
    h = jnp.maximum(h, 0.0)

    # Layer 2: Linear + ReLU
    h = jnp.dot(h.astype(mxu_dtype), w2_ref[...],
                preferred_element_type=jnp.float32) + b2_ref[...]
    h = jnp.maximum(h, 0.0)

    # Layer 3: Linear (no activation)
    out = jnp.dot(h.astype(mxu_dtype), w3_ref[...],
                  preferred_element_type=jnp.float32) + b3_ref[...]
    out_ref[...] = out.astype(out_ref.dtype)


def pack_np_encoder_params(params, input_dim_x, *, mxu_dtype=jnp.bfloat16):
    """One-time weight preprocessing (call at init / whenever params change).

    * Splits W1 into its x / y halves so torch.cat([x, y], -1) is fused.
    * Zero-pads the hidden dim to a multiple of 128 (lane-dense intermediates;
      padding is mathematically inert: zero weights + zero biases).
    * Casts weights to the MXU input dtype (bf16 by default); biases stay f32.
    * r_dim is NOT padded -> the kernel writes an (M, r_dim) output directly.
    """
    w1, b1, w2, b2, w3, b3 = params
    hidden = w1.shape[1]
    r_dim = w3.shape[1]
    dx = input_dim_x
    hid_p = _round_up(hidden, 128)
    ph = hid_p - hidden

    w1x = jnp.pad(w1[:dx].astype(mxu_dtype), ((0, 0), (0, ph)))
    w1y = jnp.pad(w1[dx:].astype(mxu_dtype), ((0, 0), (0, ph)))
    b1p = jnp.pad(b1.astype(jnp.float32), (0, ph)).reshape(1, hid_p)
    w2p = jnp.pad(w2.astype(mxu_dtype), ((0, ph), (0, ph)))
    b2p = jnp.pad(b2.astype(jnp.float32), (0, ph)).reshape(1, hid_p)
    w3p = jnp.pad(w3.astype(mxu_dtype), ((0, ph), (0, 0)))
    b3p = b3.astype(jnp.float32).reshape(1, r_dim)
    return (w1x, w1y, b1p, w2p, b2p, w3p, b3p)


@functools.partial(jax.jit, static_argnames=("tm_max",))
def np_encoder_forward(x, y, packed, *, tm_max=1024):
    """Pallas implementation of NPEncoder.forward(x, y).

    x: [..., input_dim_x], y: [..., input_dim_y]  ->  [..., r_dim]
    `packed` comes from pack_np_encoder_params (hoisted weight preprocessing).
    """
    w1x, w1y, b1p, w2p, b2p, w3p, b3p = packed
    dx = w1x.shape[0]
    dy = w1y.shape[0]
    hid_p = w1x.shape[1]
    r_dim = w3p.shape[1]

    out_dtype = jnp.result_type(x.dtype, y.dtype)
    lead_shape = x.shape[:-1]
    m = math.prod(lead_shape) if lead_shape else 1

    if m == 0:
        return jnp.zeros((*lead_shape, r_dim), out_dtype)

    x2d = x.reshape(m, dx)
    y2d = y.reshape(m, dy)

    # ---- Row tile selection -------------------------------------------------
    # Small M: one full-extent (sublane-rounded) tile, single grid step.
    # Moderate M: exactly 2 steps so both v7x TensorCores are used.
    # Large M: tm_max rows per step (big tile amortizes ~0.35us/step overhead).
    m8 = _round_up(m, 8)
    if m8 <= 512:
        tm = m8
    else:
        tm = min(tm_max, _round_up((m + 1) // 2, 8))
    grid = (_cdiv(m, tm),)

    out2d = pl.pallas_call(
        _np_encoder_kernel,
        out_shape=jax.ShapeDtypeStruct((m, r_dim), out_dtype),
        grid_spec=pltpu.PrefetchScalarGridSpec(
            num_scalar_prefetch=0,
            grid=grid,
            in_specs=[
                pl.BlockSpec((tm, dx), lambda i: (i, 0)),        # x tile
                pl.BlockSpec((tm, dy), lambda i: (i, 0)),        # y tile
                pl.BlockSpec((dx, hid_p), lambda i: (0, 0)),     # W1 (x part)
                pl.BlockSpec((dy, hid_p), lambda i: (0, 0)),     # W1 (y part)
                pl.BlockSpec((1, hid_p), lambda i: (0, 0)),      # b1
                pl.BlockSpec((hid_p, hid_p), lambda i: (0, 0)),  # W2
                pl.BlockSpec((1, hid_p), lambda i: (0, 0)),      # b2
                pl.BlockSpec((hid_p, r_dim), lambda i: (0, 0)),  # W3
                pl.BlockSpec((1, r_dim), lambda i: (0, 0)),      # b3
            ],
            out_specs=pl.BlockSpec((tm, r_dim), lambda i: (i, 0)),
        ),
        compiler_params=pltpu.CompilerParams(
            dimension_semantics=("parallel",),
            vmem_limit_bytes=_vmem_limit_bytes(),
        ),
    )(x2d, y2d, w1x, w1y, b1p, w2p, b2p, w3p, b3p)

    return out2d.reshape(*lead_shape, r_dim)


def init_np_encoder_params(key, input_dim_x, input_dim_y, hidden_dim, r_dim,
                           dtype=jnp.float32):
    """Deterministic init mimicking torch.nn.Linear default (U[-1/sqrt(fan_in), +])."""
    d_in = input_dim_x + input_dim_y
    dims = [(d_in, hidden_dim), (hidden_dim, hidden_dim), (hidden_dim, r_dim)]
    params = []
    for (fan_in, fan_out) in dims:
        key, kw, kb = jax.random.split(key, 3)
        bound = 1.0 / (fan_in ** 0.5)
        w = jax.random.uniform(kw, (fan_in, fan_out), dtype, -bound, bound)
        b = jax.random.uniform(kb, (fan_out,), dtype, -bound, bound)
        params.extend([w, b])
    return tuple(params)


def _reference_forward(x, y, params):
    """Pure-JAX f32 reference (matches the PyTorch module)."""
    w1, b1, w2, b2, w3, b3 = params
    xy = jnp.concatenate([x, y], axis=-1)
    h = jax.nn.relu(xy @ w1 + b1)
    h = jax.nn.relu(h @ w2 + b2)
    return h @ w3 + b3


if __name__ == "__main__":
    # Small shapes consistent with NPEncoder usage: x:[B, N, dx], y:[B, N, dy].
    batch, n_points = 2, 8
    input_dim_x, input_dim_y = 3, 2
    hidden_dim, r_dim = 32, 16

    key = jax.random.PRNGKey(0)
    kx, ky, kp = jax.random.split(key, 3)
    x = jax.random.normal(kx, (batch, n_points, input_dim_x), jnp.float32)
    y = jax.random.normal(ky, (batch, n_points, input_dim_y), jnp.float32)
    params = init_np_encoder_params(kp, input_dim_x, input_dim_y,
                                    hidden_dim, r_dim)
    packed = pack_np_encoder_params(params, input_dim_x)  # one-time preprocessing
    packed = jax.tree_util.tree_map(jax.block_until_ready, packed)

    out = jax.block_until_ready(np_encoder_forward(x, y, packed))
    ref = _reference_forward(x, y, params)
    assert out.shape == (batch, n_points, r_dim), out.shape
    assert bool(jnp.all(jnp.isfinite(out))), "non-finite output"
    # bf16 MXU operands with f32 accumulation -> loosened tolerance vs f32 ref.
    assert jnp.allclose(out, ref, atol=5e-2, rtol=5e-2), "mismatch vs reference"

    # A second, non-divisible / larger shape: exercises ragged last block,
    # a 2-step grid (v7x megacore path) and masked partial-block stores.
    x2 = jax.random.normal(kx, (3, 555, input_dim_x), jnp.float32)
    y2 = jax.random.normal(ky, (3, 555, input_dim_y), jnp.float32)
    out2 = jax.block_until_ready(np_encoder_forward(x2, y2, packed))
    ref2 = _reference_forward(x2, y2, params)
    assert out2.shape == (3, 555, r_dim), out2.shape
    assert bool(jnp.all(jnp.isfinite(out2))), "non-finite output (tiled case)"
    assert jnp.allclose(out2, ref2, atol=5e-2, rtol=5e-2), "mismatch (tiled case)"

    print("KERNEL_OK")
</pallas_src>

<mosaic_0001>
module attributes {stable_mosaic.version = 11 : i64} {
  func.func @_np_encoder_kernel(%arg0: i32, %arg1: memref<16x3xf32, #tpu.memory_space<vmem>>, %arg2: memref<16x2xf32, #tpu.memory_space<vmem>>, %arg3: memref<3x128xbf16, #tpu.memory_space<vmem>>, %arg4: memref<2x128xbf16, #tpu.memory_space<vmem>>, %arg5: memref<1x128xf32, #tpu.memory_space<vmem>>, %arg6: memref<128x128xbf16, #tpu.memory_space<vmem>>, %arg7: memref<1x128xf32, #tpu.memory_space<vmem>>, %arg8: memref<128x16xbf16, #tpu.memory_space<vmem>>, %arg9: memref<1x16xf32, #tpu.memory_space<vmem>>, %arg10: memref<16x16xf32, #tpu.memory_space<vmem>>) attributes {dimension_semantics = [#tpu.dimension_semantics<parallel>], iteration_bounds = array<i64: 1>, scalar_prefetch = 0 : i64, scratch_operands = 0 : i64, tpu.core_type = #tpu.core_type<tc>, window_params = [{transform_indices = @transform_0, window_bounds = array<i64: 16, 3>}, {transform_indices = @transform_1, window_bounds = array<i64: 16, 2>}, {pipeline_mode = #tpu.pipeline_mode<synchronous>, transform_indices = @transform_2, window_bounds = array<i64: 3, 128>}, {pipeline_mode = #tpu.pipeline_mode<synchronous>, transform_indices = @transform_3, window_bounds = array<i64: 2, 128>}, {pipeline_mode = #tpu.pipeline_mode<synchronous>, transform_indices = @transform_4, window_bounds = array<i64: 1, 128>}, {pipeline_mode = #tpu.pipeline_mode<synchronous>, transform_indices = @transform_5, window_bounds = array<i64: 128, 128>}, {pipeline_mode = #tpu.pipeline_mode<synchronous>, transform_indices = @transform_6, window_bounds = array<i64: 1, 128>}, {pipeline_mode = #tpu.pipeline_mode<synchronous>, transform_indices = @transform_7, window_bounds = array<i64: 128, 16>}, {pipeline_mode = #tpu.pipeline_mode<synchronous>, transform_indices = @transform_8, window_bounds = array<i64: 1, 16>}, {transform_indices = @transform_9, window_bounds = array<i64: 16, 16>}]} {
    %c0 = arith.constant 0 : index
    %c0_0 = arith.constant 0 : index
    %0 = vector.load %arg3[%c0, %c0_0] : memref<3x128xbf16, #tpu.memory_space<vmem>>, vector<3x128xbf16>
    %c0_1 = arith.constant 0 : index
    %c0_2 = arith.constant 0 : index
    %1 = vector.load %arg4[%c0_1, %c0_2] : memref<2x128xbf16, #tpu.memory_space<vmem>>, vector<2x128xbf16>
    %c0_3 = arith.constant 0 : index
    %c0_4 = arith.constant 0 : index
    %2 = vector.load %arg1[%c0_3, %c0_4] : memref<16x3xf32, #tpu.memory_space<vmem>>, vector<16x3xf32>
    %3 = arith.truncf %2 : vector<16x3xf32> to vector<16x3xbf16>
    %cst = arith.constant dense<0.000000e+00> : vector<16x128xf32>
    %4 = tpu.matmul %3, %0, %cst {dimension_numbers = #tpu.dot_dimension_numbers<[1], [0], [0], [1], [0, 0, 1, 1], [], []>} : vector<16x3xbf16>, vector<3x128xbf16>, vector<16x128xf32> -> vector<16x128xf32>
    %c0_5 = arith.constant 0 : index
    %c0_6 = arith.constant 0 : index
    %5 = vector.load %arg2[%c0_5, %c0_6] : memref<16x2xf32, #tpu.memory_space<vmem>>, vector<16x2xf32>
    %6 = arith.truncf %5 : vector<16x2xf32> to vector<16x2xbf16>
    %cst_7 = arith.constant dense<0.000000e+00> : vector<16x128xf32>
    %7 = tpu.matmul %6, %1, %cst_7 {dimension_numbers = #tpu.dot_dimension_numbers<[1], [0], [0], [1], [0, 0, 1, 1], [], []>} : vector<16x2xbf16>, vector<2x128xbf16>, vector<16x128xf32> -> vector<16x128xf32>
    %8 = arith.addf %4, %7 : vector<16x128xf32>
    %c0_8 = arith.constant 0 : index
    %c0_9 = arith.constant 0 : index
    %9 = vector.load %arg5[%c0_8, %c0_9] : memref<1x128xf32, #tpu.memory_space<vmem>>, vector<1x128xf32>
    %10 = vector.broadcast %9 : vector<1x128xf32> to vector<16x128xf32>
    %11 = arith.addf %8, %10 : vector<16x128xf32>
    %cst_10 = arith.constant 0.000000e+00 : f32
    %12 = vector.broadcast %cst_10 : f32 to vector<16x128xf32>
    %13 = arith.maximumf %11, %12 : vector<16x128xf32>
    %14 = arith.truncf %13 : vector<16x128xf32> to vector<16x128xbf16>
    %c0_11 = arith.constant 0 : index
    %c0_12 = arith.constant 0 : index
    %15 = vector.load %arg6[%c0_11, %c0_12] : memref<128x128xbf16, #tpu.memory_space<vmem>>, vector<128x128xbf16>
    %cst_13 = arith.constant dense<0.000000e+00> : vector<16x128xf32>
    %16 = tpu.matmul %14, %15, %cst_13 {dimension_numbers = #tpu.dot_dimension_numbers<[1], [0], [0], [1], [0, 0, 1, 1], [], []>} : vector<16x128xbf16>, vector<128x128xbf16>, vector<16x128xf32> -> vector<16x128xf32>
    %c0_14 = arith.constant 0 : index
    %c0_15 = arith.constant 0 : index
    %17 = vector.load %arg7[%c0_14, %c0_15] : memref<1x128xf32, #tpu.memory_space<vmem>>, vector<1x128xf32>
    %18 = vector.broadcast %17 : vector<1x128xf32> to vector<16x128xf32>
    %19 = arith.addf %16, %18 : vector<16x128xf32>
    %cst_16 = arith.constant 0.000000e+00 : f32
    %20 = vector.broadcast %cst_16 : f32 to vector<16x128xf32>
    %21 = arith.maximumf %19, %20 : vector<16x128xf32>
    %22 = arith.truncf %21 : vector<16x128xf32> to vector<16x128xbf16>
    %c0_17 = arith.constant 0 : index
    %c0_18 = arith.constant 0 : index
    %23 = vector.load %arg8[%c0_17, %c0_18] : memref<128x16xbf16, #tpu.memory_space<vmem>>, vector<128x16xbf16>
    %cst_19 = arith.constant dense<0.000000e+00> : vector<16x16xf32>
    %24 = tpu.matmul %22, %23, %cst_19 {dimension_numbers = #tpu.dot_dimension_numbers<[1], [0], [0], [1], [0, 0, 1, 1], [], []>} : vector<16x128xbf16>, vector<128x16xbf16>, vector<16x16xf32> -> vector<16x16xf32>
    %c0_20 = arith.constant 0 : index
    %c0_21 = arith.constant 0 : index
    %25 = vector.load %arg9[%c0_20, %c0_21] : memref<1x16xf32, #tpu.memory_space<vmem>>, vector<1x16xf32>
    %26 = vector.broadcast %25 : vector<1x16xf32> to vector<16x16xf32>
    %27 = arith.addf %24, %26 : vector<16x16xf32>
    %c0_22 = arith.constant 0 : index
    %c0_23 = arith.constant 0 : index
    %28 = vector.load %arg10[%c0_22, %c0_23] : memref<16x16xf32, #tpu.memory_space<vmem>>, vector<16x16xf32>
    tpu.vector_store %arg10[%c0_22, %c0_23], %27 {strides = array<i32>} : memref<16x16xf32, #tpu.memory_space<vmem>>, vector<16x16xf32>,
    return
  }
  func.func @transform_0(%arg0: i32) -> (i32, i32) {
    %c0_i32 = arith.constant 0 : i32
    %c0_i32_0 = arith.constant 0 : i32
    return %arg0, %c0_i32 : i32, i32
  }
  func.func @transform_1(%arg0: i32) -> (i32, i32) {
    %c0_i32 = arith.constant 0 : i32
    %c0_i32_0 = arith.constant 0 : i32
    return %arg0, %c0_i32 : i32, i32
  }
  func.func @transform_2(%arg0: i32) -> (i32, i32) {
    %c0_i32 = arith.constant 0 : i32
    %c0_i32_0 = arith.constant 0 : i32
    %c0_i32_1 = arith.constant 0 : i32
    return %c0_i32, %c0_i32_0 : i32, i32
  }
  func.func @transform_3(%arg0: i32) -> (i32, i32) {
    %c0_i32 = arith.constant 0 : i32
    %c0_i32_0 = arith.constant 0 : i32
    %c0_i32_1 = arith.constant 0 : i32
    return %c0_i32, %c0_i32_0 : i32, i32
  }
  func.func @transform_4(%arg0: i32) -> (i32, i32) {
    %c0_i32 = arith.constant 0 : i32
    %c0_i32_0 = arith.constant 0 : i32
    %c0_i32_1 = arith.constant 0 : i32
    return %c0_i32, %c0_i32_0 : i32, i32
  }
  func.func @transform_5(%arg0: i32) -> (i32, i32) {
    %c0_i32 = arith.constant 0 : i32
    %c0_i32_0 = arith.constant 0 : i32
    %c0_i32_1 = arith.constant 0 : i32
    return %c0_i32, %c0_i32_0 : i32, i32
  }
  func.func @transform_6(%arg0: i32) -> (i32, i32) {
    %c0_i32 = arith.constant 0 : i32
    %c0_i32_0 = arith.constant 0 : i32
    %c0_i32_1 = arith.constant 0 : i32
    return %c0_i32, %c0_i32_0 : i32, i32
  }
  func.func @transform_7(%arg0: i32) -> (i32, i32) {
    %c0_i32 = arith.constant 0 : i32
    %c0_i32_0 = arith.constant 0 : i32
    %c0_i32_1 = arith.constant 0 : i32
    return %c0_i32, %c0_i32_0 : i32, i32
  }
  func.func @transform_8(%arg0: i32) -> (i32, i32) {
    %c0_i32 = arith.constant 0 : i32
    %c0_i32_0 = arith.constant 0 : i32
    %c0_i32_1 = arith.constant 0 : i32
    return %c0_i32, %c0_i32_0 : i32, i32
  }
  func.func @transform_9(%arg0: i32) -> (i32, i32) {
    %c0_i32 = arith.constant 0 : i32
    %c0_i32_0 = arith.constant 0 : i32
    return %arg0, %c0_i32 : i32, i32
  }
}

</mosaic_0001>

<llo_original>
// kernel: np_encoder_forward.1
$region0: #{np_encoder_forward.1}
  #allocation0 [shape = 'u32[]', space=smem, size = 0x4, offset = 0x4, fixed_abs, tag = 'smem constant byte address 0x4 - core index']
  #allocation1 [shape = 'u32[72,128]{1,0:T(1,128)}', space=vmem, size = 0x9000, scoped, tag = 'internal scratch']
  %s0 = inlined_call_operand.vmem [shape: f32[16,3], index: 0, kind: input, shape index: {}]
  %s1 = inlined_call_operand.vmem [shape: f32[16,2], index: 1, kind: input, shape index: {}]
  %s2 = inlined_call_operand.vmem [shape: bf16[3,128], index: 2, kind: input, shape index: {}]
  %s3 = inlined_call_operand.vmem [shape: bf16[2,128], index: 3, kind: input, shape index: {}]
  %s4 = inlined_call_operand.vmem [shape: f32[1,128], index: 4, kind: input, shape index: {}]
  %s5 = inlined_call_operand.vmem [shape: bf16[128,128], index: 5, kind: input, shape index: {}]
  %s6 = inlined_call_operand.vmem [shape: f32[1,128], index: 6, kind: input, shape index: {}]
  %s7 = inlined_call_operand.vmem [shape: bf16[128,16], index: 7, kind: input, shape index: {}]
  %s8 = inlined_call_operand.vmem [shape: f32[1,16], index: 8, kind: input, shape index: {}]
  %s9 = inlined_call_operand.hbm [shape: f32[16,16], index: 9, kind: output, shape index: {}]
  %s10 = sld [smem:[#allocation0]]
  $region46: #{np_encoder_forward.1} parent=0
    _
  %s12 = ssub.s32 1, %s10
  %s13 = scalar_select 0, %s12, %s10
  $region1: #{np_encoder_forward.1} parent=0
    #allocation2 [shape = 'u8[8192]{0}', space=vmem, size = 0x2000, scoped, tag = 'output window, operand 0, single buffered']
    #allocation3 [shape = 's32[1]{0}', space=sflag, size = 0x4, scoped, tag = 'scoped memory for np_encoder_forward.1']
    %14 = vsyncpa [#allocation3], 0
    // Predicated region
    $region2: #{np_encoder_forward.1} parent=1 // pred_check
      _
    $region3: #{np_encoder_forward.1} parent=1 // pred_check_branch
      %16 = sbr.rel (0) target = $region5
    $region4: #{np_encoder_forward.1} parent=1 // pred_region
      _
    $region5: #{np_encoder_forward.1} parent=1 // pred_fallthru
      _
    // Predicated region
    $region6: #{np_encoder_forward.1} parent=1 // pred_check
      _
    $region7: #{np_encoder_forward.1} parent=1 // pred_check_branch
      %18 = sbr.rel (0) target = $region9
    $region8: #{np_encoder_forward.1} parent=1 // pred_region
      _
    $region9: #{np_encoder_forward.1} parent=1 // pred_fallthru
      _
    // Predicated region
    $region10: #{np_encoder_forward.1} parent=1 // pred_check
      _
    $region11: #{np_encoder_forward.1} parent=1 // pred_check_branch
      %20 = sbr.rel (0) target = $region13
    $region12: #{np_encoder_forward.1} parent=1 // pred_region
      _
    $region13: #{np_encoder_forward.1} parent=1 // pred_fallthru
      _
    // Predicated region
    $region14: #{np_encoder_forward.1} parent=1 // pred_check
      _
    $region15: #{np_encoder_forward.1} parent=1 // pred_check_branch
      %22 = sbr.rel (0) target = $region17
    $region16: #{np_encoder_forward.1} parent=1 // pred_region
      _
    $region17: #{np_encoder_forward.1} parent=1 // pred_fallthru
      _
    // Predicated region
    $region18: #{np_encoder_forward.1} parent=1 // pred_check
      _
    $region19: #{np_encoder_forward.1} parent=1 // pred_check_branch
      %24 = sbr.rel (0) target = $region21
    $region20: #{np_encoder_forward.1} parent=1 // pred_region
      _
    $region21: #{np_encoder_forward.1} parent=1 // pred_fallthru
      _
    // Predicated region
    $region22: #{np_encoder_forward.1} parent=1 // pred_check
      _
    $region23: #{np_encoder_forward.1} parent=1 // pred_check_branch
      %26 = sbr.rel (0) target = $region25
    $region24: #{np_encoder_forward.1} parent=1 // pred_region
      _
    $region25: #{np_encoder_forward.1} parent=1 // pred_fallthru
      _
    // Predicated region
    $region26: #{np_encoder_forward.1} parent=1 // pred_check
      _
    $region27: #{np_encoder_forward.1} parent=1 // pred_check_branch
      %28 = sbr.rel (0) target = $region29
    $region28: #{np_encoder_forward.1} parent=1 // pred_region
      _
    $region29: #{np_encoder_forward.1} parent=1 // pred_fallthru
      _
    // Predicated region
    $region30: #{np_encoder_forward.1} parent=1 // pred_check
      _
    $region31: #{np_encoder_forward.1} parent=1 // pred_check_branch
      %30 = sbr.rel (0) target = $region33
    $region32: #{np_encoder_forward.1} parent=1 // pred_region
      _
    $region33: #{np_encoder_forward.1} parent=1 // pred_fallthru
      _
    // Predicated region
    $region34: #{np_encoder_forward.1} parent=1 // pred_check
      _
    $region35: #{np_encoder_forward.1} parent=1 // pred_check_branch
      %32 = sbr.rel (0) target = $region37
    $region36: #{np_encoder_forward.1} parent=1 // pred_region
      _
    $region37: #{np_encoder_forward.1} parent=1 // pred_fallthru
      _
    %v34 = vld [vmem:[%s2] sm:$0x3]
    %v35 = vld [vmem:[%s3] sm:$0x1]
    %v36 = vld [vmem:[%s0] sm:$0xff]
    %v37 = vld [vmem:[%s0 + $0x8] sm:$0xff]
    %v38 = vpack.c.bf16 %v37, %v36
    %v39 = vld [vmem:[%s1] sm:$0xff]
    %v40 = vld [vmem:[%s1 + $0x8] sm:$0xff]
    %v41 = vpack.c.bf16 %v40, %v39
    %vm42 = vcmask 15360
    %v44 = vsel %vm42, %v41, 0
    %vm46 = vcmask 1040384
    %v48 = vsel %vm46, %v35, 0
    %50 = vmatpush.bf16.msra.mxu0 0
    %51 = vmatpush.bf16.msra.mxu0 0
    %52 = vmatpush.bf16.msra.mxu0 0
    %53 = vmatpush.bf16.msra.mxu0 0
    %54 = vmatpush.bf16.msra.mxu0 0
    %55 = vmatpush.bf16.msra.mxu0 0
    %56 = vmatpush.bf16.msra.mxu0 0
    %57 = vmatpush.bf16.msra.mxu0 %v48
    %58 = vmatmul.bf16.gmra.mxu0 %v44
    %v59 = vpop.f32.mrf.mxu0
    %v60 = vadd.f32 0.0, %v59
    %v61 = vpop.f32.mrf.mxu0
    %v62 = vadd.f32 0.0, %v61
    %63 = vdwg.mxu0
    %vm64 = vcmask 23552
    %v66 = vsel %vm64, %v38, 0
    %vm68 = vcmask 1041408
    %v69 = vsel %vm46, 4294967295, 65535
    %v70 = vsel %vm68, %v69, 0
    %v72 = vand.u32 %v34, %v70
    %74 = vmatpush.bf16.msra.mxu0 0
    %75 = vmatpush.bf16.msra.mxu0 0
    %76 = vmatpush.bf16.msra.mxu0 0
    %77 = vmatpush.bf16.msra.mxu0 0
    %78 = vmatpush.bf16.msra.mxu0 0
    %79 = vmatpush.bf16.msra.mxu0 0
    %80 = vmatpush.bf16.msra.mxu0 0
    %81 = vmatpush.bf16.msra.mxu0 %v72
    %82 = vmatmul.bf16.gmra.mxu0 %v66
    %v83 = vpop.f32.mrf.mxu0
    %v84 = vadd.f32 %v60, %v83
    %v85 = vpop.f32.mrf.mxu0
    %v86 = vadd.f32 %v62, %v85
    %87 = vdwg.mxu0
    %v88 = vld [vmem:[%s4] sm:$0x1]
    %v90 = vperm.slane %v88, 0
    %v92 = vadd.f32 %v84, %v90
    %v93 = vadd.f32 %v86, %v90
    %v94 = vmax.f32 %v92, 0.0
    %v95 = vmax.f32 %v93, 0.0
    %v96 = vpack.c.bf16 %v95, %v94
    %v97 = vld [vmem:[%s5] sm:$0xf]
    %v98 = vld [vmem:[%s5 + $0x4] sm:$0xf]
    %v99 = vld [vmem:[%s5 + $0x8] sm:$0xf]
    %v100 = vld [vmem:[%s5 + $0xc] sm:$0xf]
    %v101 = vld [vmem:[%s5 + $0x10] sm:$0xf]
    %v102 = vld [vmem:[%s5 + $0x14] sm:$0xf]
    %v103 = vld [vmem:[%s5 + $0x18] sm:$0xf]
    %v104 = vld [vmem:[%s5 + $0x1c] sm:$0xf]
    %v105 = vld [vmem:[%s5 + $0x20] sm:$0xf]
    %v106 = vld [vmem:[%s5 + $0x24] sm:$0xf]
    %v107 = vld [vmem:[%s5 + $0x28] sm:$0xf]
    %v108 = vld [vmem:[%s5 + $0x2c] sm:$0xf]
    %v109 = vld [vmem:[%s5 + $0x30] sm:$0xf]
    %v110 = vld [vmem:[%s5 + $0x34] sm:$0xf]
    %v111 = vld [vmem:[%s5 + $0x38] sm:$0xf]
    %v112 = vld [vmem:[%s5 + $0x3c] sm:$0xf]
    %v113 = vld [vmem:[%s6] sm:$0x1]
    %v115 = vperm.slane %v113, 0
    %v133 = vunpack.c.l.b16 %v97
    %v134 = vunpack.c.l.b16 %v98
    %v135 = vunpack.c.l.b16 %v99
    %v136 = vunpack.c.l.b16 %v100
    %v137 = vunpack.c.l.b16 %v101
    %v138 = vunpack.c.l.b16 %v102
    %v139 = vunpack.c.l.b16 %v103
    %v140 = vunpack.c.l.b16 %v104
    %v141 = vunpack.c.l.b16 %v105
    %v142 = vunpack.c.l.b16 %v106
    %v143 = vunpack.c.l.b16 %v107
    %v144 = vunpack.c.l.b16 %v108
    %v145 = vunpack.c.l.b16 %v109
    %v146 = vunpack.c.l.b16 %v110
    %v147 = vunpack.c.l.b16 %v111
    %v148 = vunpack.c.l.b16 %v112
    %v149 = vpack.c.b16 %v134, %v133
    %v150 = vpack.c.b16 %v136, %v135
    %v151 = vpack.c.b16 %v138, %v137
    %v152 = vpack.c.b16 %v140, %v139
    %v153 = vpack.c.b16 %v142, %v141
    %v154 = vpack.c.b16 %v144, %v143
    %v155 = vpack.c.b16 %v146, %v145
    %v156 = vpack.c.b16 %v148, %v147
    %165 = vmatpush.bf16.msra.mxu0 %v156
    %166 = vmatpush.bf16.msra.mxu0 %v155
    %167 = vmatpush.bf16.msra.mxu0 %v154
    %168 = vmatpush.bf16.msra.mxu0 %v153
    %169 = vmatpush.bf16.msra.mxu0 %v152
    %170 = vmatpush.bf16.msra.mxu0 %v151
    %171 = vmatpush.bf16.msra.mxu0 %v150
    %172 = vmatpush.bf16.msra.mxu0 %v149
    %173 = vmatmul.bf16.gmra.mxu0 %v96
    %v174 = vpop.f32.mrf.mxu0
    %v175 = vadd.f32 %v115, %v174
    %v176 = vpop.f32.mrf.mxu0
    %v177 = vadd.f32 %v115, %v176
    %178 = vdwg.mxu0
    %v179 = vmax.f32 %v175, 0.0
    %v180 = vmax.f32 %v177, 0.0
    %v181 = vpack.c.bf16 %v180, %v179
    %v182 = vld [vmem:[%s7] sm:$0xf]
    %v183 = vld [vmem:[%s7 + $0x4] sm:$0xf]
    %v184 = vld [vmem:[%s7 + $0x8] sm:$0xf]
    %v185 = vld [vmem:[%s7 + $0xc] sm:$0xf]
    %v186 = vld [vmem:[%s7 + $0x10] sm:$0xf]
    %v187 = vld [vmem:[%s7 + $0x14] sm:$0xf]
    %v188 = vld [vmem:[%s7 + $0x18] sm:$0xf]
    %v189 = vld [vmem:[%s7 + $0x1c] sm:$0xf]
    %v190 = vld [vmem:[%s7 + $0x20] sm:$0xf]
    %v191 = vld [vmem:[%s7 + $0x24] sm:$0xf]
    %v192 = vld [vmem:[%s7 + $0x28] sm:$0xf]
    %v193 = vld [vmem:[%s7 + $0x2c] sm:$0xf]
    %v194 = vld [vmem:[%s7 + $0x30] sm:$0xf]
    %v195 = vld [vmem:[%s7 + $0x34] sm:$0xf]
    %v196 = vld [vmem:[%s7 + $0x38] sm:$0xf]
    %v197 = vld [vmem:[%s7 + $0x3c] sm:$0xf]
    %v198 = vld [vmem:[%s8] sm:$0x1]
    %v200 = vperm.slane %v198, 0
    %v218 = vunpack.c.l.b16 %v182
    %v219 = vunpack.c.l.b16 %v183
    %v220 = vunpack.c.l.b16 %v184
    %v221 = vunpack.c.l.b16 %v185
    %v222 = vunpack.c.l.b16 %v186
    %v223 = vunpack.c.l.b16 %v187
    %v224 = vunpack.c.l.b16 %v188
    %v225 = vunpack.c.l.b16 %v189
    %v226 = vunpack.c.l.b16 %v190
    %v227 = vunpack.c.l.b16 %v191
    %v228 = vunpack.c.l.b16 %v192
    %v229 = vunpack.c.l.b16 %v193
    %v230 = vunpack.c.l.b16 %v194
    %v231 = vunpack.c.l.b16 %v195
    %v232 = vunpack.c.l.b16 %v196
    %v233 = vunpack.c.l.b16 %v197
    %v234 = vpack.c.b16 %v219, %v218
    %v235 = vpack.c.b16 %v221, %v220
    %v236 = vpack.c.b16 %v223, %v222
    %v237 = vpack.c.b16 %v225, %v224
    %v238 = vpack.c.b16 %v227, %v226
    %v239 = vpack.c.b16 %v229, %v228
    %v240 = vpack.c.b16 %v231, %v230
    %v241 = vpack.c.b16 %v233, %v232
    %250 = vmatpush.bf16.msra.mxu0 %v241
    %251 = vmatpush.bf16.msra.mxu0 %v240
    %252 = vmatpush.bf16.msra.mxu0 %v239
    %253 = vmatpush.bf16.msra.mxu0 %v238
    %254 = vmatpush.bf16.msra.mxu0 %v237
    %255 = vmatpush.bf16.msra.mxu0 %v236
    %256 = vmatpush.bf16.msra.mxu0 %v235
    %257 = vmatpush.bf16.msra.mxu0 %v234
    %258 = vmatmul.bf16.gmra.mxu0 %v181
    %v259 = vpop.f32.mrf.mxu0
    %v260 = vadd.f32 %v200, %v259
    %v261 = vpop.f32.mrf.mxu0
    %v262 = vadd.f32 %v200, %v261
    %263 = vdwg.mxu0
    %vm264 = vcmask 130048
    %265 = vst.msk [vmem:[#allocation2] sm:$0xff] %vm264, %v260
    %266 = vst.msk [vmem:[#allocation2 + $0x8] sm:$0xff] %vm264, %v262
    // Predicated region
    $region38: #{np_encoder_forward.1} parent=1 // pred_check
      _
    $region39: #{np_encoder_forward.1} parent=1 // pred_check_branch
      %268 = sbr.rel (0) target = $region41
    $region40: #{np_encoder_forward.1} parent=1 // pred_region
      %270 = vsyncadd [#allocation3], 0
      %s271 = sshll.u32 [#allocation2], 4
      %s272 = int_to_ptr.vmem [resolvable:$true] %s271
      %s273 = sshll.u32 %s9, 4
      %s274 = int_to_ptr.hbm [resolvable:$true] %s273
      %279 = dma.vmem_to_hbm [thread:$0]  %s272, 256, %s274, [#allocation3], 128, 128, 8
    $region41: #{np_encoder_forward.1} parent=1 // pred_fallthru
      _
    // Predicated region
    $region42: #{np_encoder_forward.1} parent=1 // pred_check
      _
    $region43: #{np_encoder_forward.1} parent=1 // pred_check_branch
      %281 = sbr.rel (0) target = $region45
    $region44: #{np_encoder_forward.1} parent=1 // pred_region
      %283 = dma.done [#allocation3], 256
    $region45: #{np_encoder_forward.1} parent=1 // pred_fallthru
      _
    %284 = vsyncpa [#allocation3], 1

</llo_original>
